<compile_context>
chip_gen: v7x
topology: tpu7x:2x2x1
jax: 0.10.0
libtpu: 0.0.40
codegen_flags: <defaults>
</compile_context>

<pallas_src>
import jax
import jax.numpy as jnp
from jax.experimental import pallas as pl
from jax.experimental.pallas import tpu as pltpu  # noqa: F401  (TPU backend)

EPS = 1e-5

# Model dims (data.x.size(1) is unknown in the source; pick a small feature dim)
IN_FEATURES = 128
H1 = 256
H2 = 64
OUT = 2
OUT_PAD = 128          # lane-dense padded output width
BATCH = 8

# Packed per-feature parameter layout: one (PACK_ROWS, PACK_COLS) f32 array.
PACK_COLS = 256        # = max(IN_FEATURES, H1, H2, OUT_PAD)
ROW_BN1_G, ROW_BN1_B = 0, 1
ROW_B1 = 2
ROW_BN2_G, ROW_BN2_B = 3, 4
ROW_B2 = 5
ROW_BN3_G, ROW_BN3_B = 6, 7
ROW_B3 = 8
PACK_ROWS = 9


def net_kernel(x_ref, w1_ref, w2_ref, w3_ref, p_ref, out_ref):
    x = x_ref[...]  # (N, IN_FEATURES) f32

    def vec(row, dim):
        # Static slice of the packed parameter buffer -> (1, dim) f32.
        return p_ref[row:row + 1, :dim]

    def bn(h, gamma, beta):
        # Training-mode BatchNorm1d: batch mean, biased variance, f32 math.
        m = jnp.mean(h, axis=0, keepdims=True)
        d = h - m
        v = jnp.mean(d * d, axis=0, keepdims=True)
        return d * jax.lax.rsqrt(v + EPS) * gamma + beta

    def lin_relu(h, w_ref, bias):
        # bf16 MXU operands, f32 accumulation; bias add + relu in f32.
        y = jnp.dot(h.astype(jnp.bfloat16), w_ref[...],
                    preferred_element_type=jnp.float32)
        return jnp.maximum(y + bias, 0.0)

    h = bn(x, vec(ROW_BN1_G, IN_FEATURES), vec(ROW_BN1_B, IN_FEATURES))
    h = lin_relu(h, w1_ref, vec(ROW_B1, H1))

    h = bn(h, vec(ROW_BN2_G, H1), vec(ROW_BN2_B, H1))
    h = lin_relu(h, w2_ref, vec(ROW_B2, H2))

    h = bn(h, vec(ROW_BN3_G, H2), vec(ROW_BN3_B, H2))
    h = lin_relu(h, w3_ref, vec(ROW_B3, OUT_PAD))

    out_ref[...] = h  # (N, OUT_PAD) f32, lane-dense store


@jax.jit
def net_forward(x, params):
    n = x.shape[0]
    out_padded = pl.pallas_call(
        net_kernel,
        out_shape=jax.ShapeDtypeStruct((n, OUT_PAD), jnp.float32),
    )(x, params["w1"], params["w2"], params["w3p"], params["packed"])
    return out_padded[:, :OUT]


def init_params(key):
    # PyTorch Linear.reset_parameters: weights & bias uniform in ±1/sqrt(fan_in).
    def linear(k, fan_in, fan_out):
        kw, kb = jax.random.split(k)
        bound = 1.0 / (fan_in ** 0.5)
        w = jax.random.uniform(kw, (fan_in, fan_out), jnp.float32, -bound, bound)
        b = jax.random.uniform(kb, (fan_out,), jnp.float32, -bound, bound)
        return w, b

    k1, k2, k3 = jax.random.split(key, 3)
    w1, b1 = linear(k1, IN_FEATURES, H1)
    w2, b2 = linear(k2, H1, H2)
    w3, b3 = linear(k3, H2, OUT)

    # Pad w3 to OUT_PAD output columns (extra columns are zero -> relu(0)=0).
    w3p = jnp.zeros((H2, OUT_PAD), jnp.float32).at[:, :OUT].set(w3)

    # Pack all per-feature vectors into one buffer (BatchNorm1d defaults:
    # gamma=1, beta=0; beta rows stay zero).
    packed = jnp.zeros((PACK_ROWS, PACK_COLS), jnp.float32)
    packed = packed.at[ROW_BN1_G, :IN_FEATURES].set(1.0)
    packed = packed.at[ROW_B1, :H1].set(b1)
    packed = packed.at[ROW_BN2_G, :H1].set(1.0)
    packed = packed.at[ROW_B2, :H2].set(b2)
    packed = packed.at[ROW_BN3_G, :H2].set(1.0)
    packed = packed.at[ROW_B3, :OUT].set(b3)

    return {
        "w1": w1.astype(jnp.bfloat16),
        "w2": w2.astype(jnp.bfloat16),
        "w3p": w3p.astype(jnp.bfloat16),
        "packed": packed,
    }


def net_reference(x, params):
    # Pure-JAX reference with the same precision policy as the kernel
    # (f32 BN, bf16 MXU operands, f32 accumulation).
    P = params["packed"]

    def vec(row, dim):
        return P[row:row + 1, :dim]

    def bn(h, gamma, beta):
        m = jnp.mean(h, axis=0, keepdims=True)
        d = h - m
        v = jnp.mean(d * d, axis=0, keepdims=True)
        return d * jax.lax.rsqrt(v + EPS) * gamma + beta

    def lin_relu(h, w, bias):
        y = jnp.dot(h.astype(jnp.bfloat16), w, preferred_element_type=jnp.float32)
        return jnp.maximum(y + bias, 0.0)

    h = bn(x, vec(ROW_BN1_G, IN_FEATURES), vec(ROW_BN1_B, IN_FEATURES))
    h = lin_relu(h, params["w1"], vec(ROW_B1, H1))
    h = bn(h, vec(ROW_BN2_G, H1), vec(ROW_BN2_B, H1))
    h = lin_relu(h, params["w2"], vec(ROW_B2, H2))
    h = bn(h, vec(ROW_BN3_G, H2), vec(ROW_BN3_B, H2))
    h = lin_relu(h, params["w3p"], vec(ROW_B3, OUT_PAD))
    return h[:, :OUT]


if __name__ == "__main__":
    key = jax.random.PRNGKey(0)
    kx, kp = jax.random.split(key)
    x = jax.random.normal(kx, (BATCH, IN_FEATURES), jnp.float32)
    params = init_params(kp)

    out = net_forward(x, params)
    out = jax.block_until_ready(out)

    ref = net_reference(x, params)
    assert out.shape == (BATCH, OUT)
    assert jnp.allclose(out, ref, atol=1e-3, rtol=1e-3)

    print("KERNEL_OK")
</pallas_src>

<mosaic_0001>
module attributes {stable_mosaic.version = 11 : i64} {
  func.func @net_kernel(%arg0: memref<8x128xf32, #tpu.memory_space<vmem>>, %arg1: memref<128x256xbf16, #tpu.memory_space<vmem>>, %arg2: memref<256x64xbf16, #tpu.memory_space<vmem>>, %arg3: memref<64x128xbf16, #tpu.memory_space<vmem>>, %arg4: memref<9x256xf32, #tpu.memory_space<vmem>>, %arg5: memref<8x128xf32, #tpu.memory_space<vmem>>) attributes {dimension_semantics = [], scalar_prefetch = 0 : i64, scratch_operands = 0 : i64, tpu.core_type = #tpu.core_type<tc>} {
    %c0 = arith.constant 0 : index
    %c0_0 = arith.constant 0 : index
    %0 = vector.load %arg0[%c0, %c0_0] : memref<8x128xf32, #tpu.memory_space<vmem>>, vector<8x128xf32>
    %c0_1 = arith.constant 0 : index
    %c0_2 = arith.constant 0 : index
    %1 = vector.load %arg4[%c0_1, %c0_2] : memref<9x256xf32, #tpu.memory_space<vmem>>, vector<1x128xf32>
    %c1 = arith.constant 1 : index
    %c0_3 = arith.constant 0 : index
    %2 = vector.load %arg4[%c1, %c0_3] : memref<9x256xf32, #tpu.memory_space<vmem>>, vector<1x128xf32>
    %cst = arith.constant dense<0.000000e+00> : vector<128xf32>
    %3 = vector.multi_reduction <add>, %0, %cst [0] : vector<8x128xf32> to vector<128xf32>
    %4 = vector.shape_cast %3 : vector<128xf32> to vector<1x128xf32>
    %cst_4 = arith.constant 8.000000e+00 : f32
    %5 = vector.broadcast %cst_4 : f32 to vector<1x128xf32>
    %6 = arith.divf %4, %5 : vector<1x128xf32>
    %7 = vector.broadcast %6 : vector<1x128xf32> to vector<8x128xf32>
    %8 = arith.subf %0, %7 : vector<8x128xf32>
    %9 = arith.mulf %8, %8 : vector<8x128xf32>
    %cst_5 = arith.constant dense<0.000000e+00> : vector<128xf32>
    %10 = vector.multi_reduction <add>, %9, %cst_5 [0] : vector<8x128xf32> to vector<128xf32>
    %11 = vector.shape_cast %10 : vector<128xf32> to vector<1x128xf32>
    %cst_6 = arith.constant 8.000000e+00 : f32
    %12 = vector.broadcast %cst_6 : f32 to vector<1x128xf32>
    %13 = arith.divf %11, %12 : vector<1x128xf32>
    %cst_7 = arith.constant 9.99999974E-6 : f32
    %14 = vector.broadcast %cst_7 : f32 to vector<1x128xf32>
    %15 = arith.addf %13, %14 : vector<1x128xf32>
    %16 = math.rsqrt %15 : vector<1x128xf32>
    %17 = vector.broadcast %16 : vector<1x128xf32> to vector<8x128xf32>
    %18 = arith.mulf %8, %17 : vector<8x128xf32>
    %19 = vector.broadcast %1 : vector<1x128xf32> to vector<8x128xf32>
    %20 = arith.mulf %18, %19 : vector<8x128xf32>
    %21 = vector.broadcast %2 : vector<1x128xf32> to vector<8x128xf32>
    %22 = arith.addf %20, %21 : vector<8x128xf32>
    %c2 = arith.constant 2 : index
    %c0_8 = arith.constant 0 : index
    %23 = vector.load %arg4[%c2, %c0_8] : memref<9x256xf32, #tpu.memory_space<vmem>>, vector<1x256xf32>
    %24 = arith.truncf %22 : vector<8x128xf32> to vector<8x128xbf16>
    %c0_9 = arith.constant 0 : index
    %c0_10 = arith.constant 0 : index
    %25 = vector.load %arg1[%c0_9, %c0_10] : memref<128x256xbf16, #tpu.memory_space<vmem>>, vector<128x256xbf16>
    %cst_11 = arith.constant dense<0.000000e+00> : vector<8x256xf32>
    %26 = tpu.matmul %24, %25, %cst_11 {dimension_numbers = #tpu.dot_dimension_numbers<[1], [0], [0], [1], [0, 0, 1, 1], [], []>} : vector<8x128xbf16>, vector<128x256xbf16>, vector<8x256xf32> -> vector<8x256xf32>
    %27 = vector.broadcast %23 : vector<1x256xf32> to vector<8x256xf32>
    %28 = arith.addf %26, %27 : vector<8x256xf32>
    %cst_12 = arith.constant 0.000000e+00 : f32
    %29 = vector.broadcast %cst_12 : f32 to vector<8x256xf32>
    %30 = arith.maximumf %28, %29 : vector<8x256xf32>
    %c3 = arith.constant 3 : index
    %c0_13 = arith.constant 0 : index
    %31 = vector.load %arg4[%c3, %c0_13] : memref<9x256xf32, #tpu.memory_space<vmem>>, vector<1x256xf32>
    %c4 = arith.constant 4 : index
    %c0_14 = arith.constant 0 : index
    %32 = vector.load %arg4[%c4, %c0_14] : memref<9x256xf32, #tpu.memory_space<vmem>>, vector<1x256xf32>
    %cst_15 = arith.constant dense<0.000000e+00> : vector<256xf32>
    %33 = vector.multi_reduction <add>, %30, %cst_15 [0] : vector<8x256xf32> to vector<256xf32>
    %34 = vector.shape_cast %33 : vector<256xf32> to vector<1x256xf32>
    %cst_16 = arith.constant 8.000000e+00 : f32
    %35 = vector.broadcast %cst_16 : f32 to vector<1x256xf32>
    %36 = arith.divf %34, %35 : vector<1x256xf32>
    %37 = vector.broadcast %36 : vector<1x256xf32> to vector<8x256xf32>
    %38 = arith.subf %30, %37 : vector<8x256xf32>
    %39 = arith.mulf %38, %38 : vector<8x256xf32>
    %cst_17 = arith.constant dense<0.000000e+00> : vector<256xf32>
    %40 = vector.multi_reduction <add>, %39, %cst_17 [0] : vector<8x256xf32> to vector<256xf32>
    %41 = vector.shape_cast %40 : vector<256xf32> to vector<1x256xf32>
    %cst_18 = arith.constant 8.000000e+00 : f32
    %42 = vector.broadcast %cst_18 : f32 to vector<1x256xf32>
    %43 = arith.divf %41, %42 : vector<1x256xf32>
    %cst_19 = arith.constant 9.99999974E-6 : f32
    %44 = vector.broadcast %cst_19 : f32 to vector<1x256xf32>
    %45 = arith.addf %43, %44 : vector<1x256xf32>
    %46 = math.rsqrt %45 : vector<1x256xf32>
    %47 = vector.broadcast %46 : vector<1x256xf32> to vector<8x256xf32>
    %48 = arith.mulf %38, %47 : vector<8x256xf32>
    %49 = vector.broadcast %31 : vector<1x256xf32> to vector<8x256xf32>
    %50 = arith.mulf %48, %49 : vector<8x256xf32>
    %51 = vector.broadcast %32 : vector<1x256xf32> to vector<8x256xf32>
    %52 = arith.addf %50, %51 : vector<8x256xf32>
    %c5 = arith.constant 5 : index
    %c0_20 = arith.constant 0 : index
    %53 = vector.load %arg4[%c5, %c0_20] : memref<9x256xf32, #tpu.memory_space<vmem>>, vector<1x64xf32>
    %54 = arith.truncf %52 : vector<8x256xf32> to vector<8x256xbf16>
    %c0_21 = arith.constant 0 : index
    %c0_22 = arith.constant 0 : index
    %55 = vector.load %arg2[%c0_21, %c0_22] : memref<256x64xbf16, #tpu.memory_space<vmem>>, vector<256x64xbf16>
    %cst_23 = arith.constant dense<0.000000e+00> : vector<8x64xf32>
    %56 = tpu.matmul %54, %55, %cst_23 {dimension_numbers = #tpu.dot_dimension_numbers<[1], [0], [0], [1], [0, 0, 1, 1], [], []>} : vector<8x256xbf16>, vector<256x64xbf16>, vector<8x64xf32> -> vector<8x64xf32>
    %57 = vector.broadcast %53 : vector<1x64xf32> to vector<8x64xf32>
    %58 = arith.addf %56, %57 : vector<8x64xf32>
    %cst_24 = arith.constant 0.000000e+00 : f32
    %59 = vector.broadcast %cst_24 : f32 to vector<8x64xf32>
    %60 = arith.maximumf %58, %59 : vector<8x64xf32>
    %c6 = arith.constant 6 : index
    %c0_25 = arith.constant 0 : index
    %61 = vector.load %arg4[%c6, %c0_25] : memref<9x256xf32, #tpu.memory_space<vmem>>, vector<1x64xf32>
    %c7 = arith.constant 7 : index
    %c0_26 = arith.constant 0 : index
    %62 = vector.load %arg4[%c7, %c0_26] : memref<9x256xf32, #tpu.memory_space<vmem>>, vector<1x64xf32>
    %cst_27 = arith.constant dense<0.000000e+00> : vector<64xf32>
    %63 = vector.multi_reduction <add>, %60, %cst_27 [0] : vector<8x64xf32> to vector<64xf32>
    %64 = vector.shape_cast %63 : vector<64xf32> to vector<1x64xf32>
    %cst_28 = arith.constant 8.000000e+00 : f32
    %65 = vector.broadcast %cst_28 : f32 to vector<1x64xf32>
    %66 = arith.divf %64, %65 : vector<1x64xf32>
    %67 = vector.broadcast %66 : vector<1x64xf32> to vector<8x64xf32>
    %68 = arith.subf %60, %67 : vector<8x64xf32>
    %69 = arith.mulf %68, %68 : vector<8x64xf32>
    %cst_29 = arith.constant dense<0.000000e+00> : vector<64xf32>
    %70 = vector.multi_reduction <add>, %69, %cst_29 [0] : vector<8x64xf32> to vector<64xf32>
    %71 = vector.shape_cast %70 : vector<64xf32> to vector<1x64xf32>
    %cst_30 = arith.constant 8.000000e+00 : f32
    %72 = vector.broadcast %cst_30 : f32 to vector<1x64xf32>
    %73 = arith.divf %71, %72 : vector<1x64xf32>
    %cst_31 = arith.constant 9.99999974E-6 : f32
    %74 = vector.broadcast %cst_31 : f32 to vector<1x64xf32>
    %75 = arith.addf %73, %74 : vector<1x64xf32>
    %76 = math.rsqrt %75 : vector<1x64xf32>
    %77 = vector.broadcast %76 : vector<1x64xf32> to vector<8x64xf32>
    %78 = arith.mulf %68, %77 : vector<8x64xf32>
    %79 = vector.broadcast %61 : vector<1x64xf32> to vector<8x64xf32>
    %80 = arith.mulf %78, %79 : vector<8x64xf32>
    %81 = vector.broadcast %62 : vector<1x64xf32> to vector<8x64xf32>
    %82 = arith.addf %80, %81 : vector<8x64xf32>
    %c8 = arith.constant 8 : index
    %c0_32 = arith.constant 0 : index
    %83 = vector.load %arg4[%c8, %c0_32] : memref<9x256xf32, #tpu.memory_space<vmem>>, vector<1x128xf32>
    %84 = arith.truncf %82 : vector<8x64xf32> to vector<8x64xbf16>
    %c0_33 = arith.constant 0 : index
    %c0_34 = arith.constant 0 : index
    %85 = vector.load %arg3[%c0_33, %c0_34] : memref<64x128xbf16, #tpu.memory_space<vmem>>, vector<64x128xbf16>
    %cst_35 = arith.constant dense<0.000000e+00> : vector<8x128xf32>
    %86 = tpu.matmul %84, %85, %cst_35 {dimension_numbers = #tpu.dot_dimension_numbers<[1], [0], [0], [1], [0, 0, 1, 1], [], []>} : vector<8x64xbf16>, vector<64x128xbf16>, vector<8x128xf32> -> vector<8x128xf32>
    %87 = vector.broadcast %83 : vector<1x128xf32> to vector<8x128xf32>
    %88 = arith.addf %86, %87 : vector<8x128xf32>
    %cst_36 = arith.constant 0.000000e+00 : f32
    %89 = vector.broadcast %cst_36 : f32 to vector<8x128xf32>
    %90 = arith.maximumf %88, %89 : vector<8x128xf32>
    %c0_37 = arith.constant 0 : index
    %c0_38 = arith.constant 0 : index
    %91 = vector.load %arg5[%c0_37, %c0_38] : memref<8x128xf32, #tpu.memory_space<vmem>>, vector<8x128xf32>
    tpu.vector_store %arg5[%c0_37, %c0_38], %90 {strides = array<i32>} : memref<8x128xf32, #tpu.memory_space<vmem>>, vector<8x128xf32>,
    return
  }
}

</mosaic_0001>

<llo_original>
// kernel: net_forward.1
$region0: #{net_forward.1}
  #allocation0 [shape = 'u32[]', space=smem, size = 0x4, offset = 0x4, fixed_abs, tag = 'smem constant byte address 0x4 - core index']
  #allocation1 [shape = 'u32[144,128]{1,0:T(1,128)}', space=vmem, size = 0x12000, scoped, tag = 'internal scratch']
  %s0 = inlined_call_operand.hbm [shape: f32[8,128], index: 0, kind: input, shape index: {}]
  %s1 = inlined_call_operand.vmem [shape: bf16[128,256], index: 1, kind: input, shape index: {}]
  %s2 = inlined_call_operand.vmem [shape: bf16[256,64], index: 2, kind: input, shape index: {}]
  %s3 = inlined_call_operand.vmem [shape: bf16[64,128], index: 3, kind: input, shape index: {}]
  %s4 = inlined_call_operand.vmem [shape: f32[9,256], index: 4, kind: input, shape index: {}]
  %s5 = inlined_call_operand.vmem [shape: f32[8,128], index: 5, kind: output, shape index: {}]
  %s6 = sld [smem:[#allocation0]]
  $region34: #{net_forward.1} parent=0
    _
  %s8 = ssub.s32 1, %s6
  %s9 = scalar_select 0, %s8, %s6
  $region1: #{net_forward.1} parent=0
    #allocation2 [shape = 'u8[4096]{0}', space=vmem, size = 0x1000, scoped, tag = 'input window, operand 0, single buffered']
    #allocation3 [shape = 's32[1]{0}', space=sflag, size = 0x4, scoped, tag = 'scoped memory for net_forward.1']
    %10 = vsyncpa [#allocation3], 0
    // Predicated region
    $region2: #{net_forward.1} parent=1 // pred_check
      _
    $region3: #{net_forward.1} parent=1 // pred_check_branch
      %12 = sbr.rel (0) target = $region5
    $region4: #{net_forward.1} parent=1 // pred_region
      %s14 = ssub.s32 128, 128
      %15 = vsyncadd [#allocation3], %s14
      %s17 = sshll.u32 [#allocation2], 4
      %s18 = int_to_ptr.vmem [resolvable:$true] %s17
      %20 = dma.hbm_to_vmem [thread:$0]  %s0, 128, %s18, [#allocation3]
    $region5: #{net_forward.1} parent=1 // pred_fallthru
      _
    // Predicated region
    $region6: #{net_forward.1} parent=1 // pred_check
      _
    $region7: #{net_forward.1} parent=1 // pred_check_branch
      %22 = sbr.rel (0) target = $region9
    $region8: #{net_forward.1} parent=1 // pred_region
      _
    $region9: #{net_forward.1} parent=1 // pred_fallthru
      _
    // Predicated region
    $region10: #{net_forward.1} parent=1 // pred_check
      _
    $region11: #{net_forward.1} parent=1 // pred_check_branch
      %24 = sbr.rel (0) target = $region13
    $region12: #{net_forward.1} parent=1 // pred_region
      _
    $region13: #{net_forward.1} parent=1 // pred_fallthru
      _
    // Predicated region
    $region14: #{net_forward.1} parent=1 // pred_check
      _
    $region15: #{net_forward.1} parent=1 // pred_check_branch
      %26 = sbr.rel (0) target = $region17
    $region16: #{net_forward.1} parent=1 // pred_region
      _
    $region17: #{net_forward.1} parent=1 // pred_fallthru
      _
    // Predicated region
    $region18: #{net_forward.1} parent=1 // pred_check
      _
    $region19: #{net_forward.1} parent=1 // pred_check_branch
      %28 = sbr.rel (0) target = $region21
    $region20: #{net_forward.1} parent=1 // pred_region
      _
    $region21: #{net_forward.1} parent=1 // pred_fallthru
      _
    // Predicated region
    $region22: #{net_forward.1} parent=1 // pred_check
      _
    $region23: #{net_forward.1} parent=1 // pred_check_branch
      %30 = sbr.rel (0) target = $region25
    $region24: #{net_forward.1} parent=1 // pred_region
      %31 = dma.done [#allocation3], 128
    $region25: #{net_forward.1} parent=1 // pred_fallthru
      _
    %v33 = vld [vmem:[#allocation2] sm:$0xff]
    %v34 = vld [vmem:[%s4] ss:$0 sm:$0xff]
    %v35 = vld [vmem:[%s4 + $0x1] ss:$0 sm:$0xff]
    %v36 = vrot.slane %v33, 4
    %v37 = vadd.f32 %v33, %v36
    %v38 = vrot.slane %v37, 2
    %v39 = vadd.f32 %v37, %v38
    %v40 = vrot.slane %v39, 1
    %v41 = vadd.f32 %v39, %v40
    %v42 = vrcp.pop 8.0
    %v43 = vmul.f32 %v41, %v42
    %v44 = vsub.f32 %v33, %v43
    %v45 = vmul.f32 %v44, %v44
    %v46 = vrot.slane %v45, 4
    %v47 = vadd.f32 %v45, %v46
    %v48 = vrot.slane %v47, 2
    %v49 = vadd.f32 %v47, %v48
    %v50 = vrot.slane %v49, 1
    %v51 = vadd.f32 %v49, %v50
    %v52 = vmul.f32 %v51, %v42
    %v53 = vadd.f32 %v52, 1e-05
    %v54 = vrsqrt.pop %v53
    %v55 = vmul.f32 %v44, %v54
    %v56 = vmul.f32 %v55, %v34
    %v57 = vadd.f32 %v56, %v35
    %s58 = scalar_lea.vmem %s4, 2
    %v59 = vld [vmem:[%s58] ss:$8 sm:$0x3]
    %v60 = vpack.c.bf16 %v57, %v57
    %v61 = vld [vmem:[%s1] sm:$0xff]
    %v62 = vld [vmem:[%s1 + $0x8] sm:$0xff]
    %v63 = vld [vmem:[%s1 + $0x10] sm:$0xff]
    %v64 = vld [vmem:[%s1 + $0x18] sm:$0xff]
    %v65 = vld [vmem:[%s1 + $0x20] sm:$0xff]
    %v66 = vld [vmem:[%s1 + $0x28] sm:$0xff]
    %v67 = vld [vmem:[%s1 + $0x30] sm:$0xff]
    %v68 = vld [vmem:[%s1 + $0x38] sm:$0xff]
    %v69 = vld [vmem:[%s1 + $0x40] sm:$0xff]
    %v70 = vld [vmem:[%s1 + $0x48] sm:$0xff]
    %v71 = vld [vmem:[%s1 + $0x50] sm:$0xff]
    %v72 = vld [vmem:[%s1 + $0x58] sm:$0xff]
    %v73 = vld [vmem:[%s1 + $0x60] sm:$0xff]
    %v74 = vld [vmem:[%s1 + $0x68] sm:$0xff]
    %v75 = vld [vmem:[%s1 + $0x70] sm:$0xff]
    %v76 = vld [vmem:[%s1 + $0x78] sm:$0xff]
    %v78 = vlaneseq
    %v79 = vshrl.u32 %v78, 7
    %v80 = vsub.s32 0, %v79
    %v81 = vrot.slane %v59, %v80
    %v82 = vlaneseq
    %v83 = vshrl.u32 %v82, 7
    %v84 = vsub.s32 1, %v83
    %v85 = vrot.slane %v59, %v84
    %v104 = vunpack.c.l.b16 %v61
    %v105 = vunpack.c.h.b16 %v61
    %v106 = vunpack.c.l.b16 %v62
    %v107 = vunpack.c.h.b16 %v62
    %v108 = vunpack.c.l.b16 %v63
    %v109 = vunpack.c.h.b16 %v63
    %v110 = vunpack.c.l.b16 %v64
    %v111 = vunpack.c.h.b16 %v64
    %v112 = vunpack.c.l.b16 %v65
    %v113 = vunpack.c.h.b16 %v65
    %v114 = vunpack.c.l.b16 %v66
    %v115 = vunpack.c.h.b16 %v66
    %v116 = vunpack.c.l.b16 %v67
    %v117 = vunpack.c.h.b16 %v67
    %v118 = vunpack.c.l.b16 %v68
    %v119 = vunpack.c.h.b16 %v68
    %v120 = vunpack.c.l.b16 %v69
    %v121 = vunpack.c.h.b16 %v69
    %v122 = vunpack.c.l.b16 %v70
    %v123 = vunpack.c.h.b16 %v70
    %v124 = vunpack.c.l.b16 %v71
    %v125 = vunpack.c.h.b16 %v71
    %v126 = vunpack.c.l.b16 %v72
    %v127 = vunpack.c.h.b16 %v72
    %v128 = vunpack.c.l.b16 %v73
    %v129 = vunpack.c.h.b16 %v73
    %v130 = vunpack.c.l.b16 %v74
    %v131 = vunpack.c.h.b16 %v74
    %v132 = vunpack.c.l.b16 %v75
    %v133 = vunpack.c.h.b16 %v75
    %v134 = vunpack.c.l.b16 %v76
    %v135 = vunpack.c.h.b16 %v76
    %v136 = vpack.c.b16 %v106, %v104
    %v137 = vpack.c.b16 %v107, %v105
    %v138 = vpack.c.b16 %v110, %v108
    %v139 = vpack.c.b16 %v111, %v109
    %v140 = vpack.c.b16 %v114, %v112
    %v141 = vpack.c.b16 %v115, %v113
    %v142 = vpack.c.b16 %v118, %v116
    %v143 = vpack.c.b16 %v119, %v117
    %v144 = vpack.c.b16 %v122, %v120
    %v145 = vpack.c.b16 %v123, %v121
    %v146 = vpack.c.b16 %v126, %v124
    %v147 = vpack.c.b16 %v127, %v125
    %v148 = vpack.c.b16 %v130, %v128
    %v149 = vpack.c.b16 %v131, %v129
    %v150 = vpack.c.b16 %v134, %v132
    %v151 = vpack.c.b16 %v135, %v133
    %168 = vmatprep.subr.bf16.mxu0 %v137
    %169 = vmatpush1.bf16.msra.mxu0 %v136
    %170 = vmatprep.subr.bf16.mxu0 %v139
    %171 = vmatpush1.bf16.msra.mxu0 %v138
    %172 = vmatprep.subr.bf16.mxu0 %v141
    %173 = vmatpush1.bf16.msra.mxu0 %v140
    %174 = vmatprep.subr.bf16.mxu0 %v143
    %175 = vmatpush1.bf16.msra.mxu0 %v142
    %176 = vmatprep.subr.bf16.mxu0 %v145
    %177 = vmatpush1.bf16.msra.mxu0 %v144
    %178 = vmatprep.subr.bf16.mxu0 %v147
    %179 = vmatpush1.bf16.msra.mxu0 %v146
    %180 = vmatprep.subr.bf16.mxu0 %v149
    %181 = vmatpush1.bf16.msra.mxu0 %v148
    %182 = vmatprep.subr.bf16.mxu0 %v151
    %183 = vmatpush1.bf16.msra.mxu0 %v150
    %184 = vmatprep.subr.bf16.mxu0 0
    %185 = vmatpush1.bf16.msra.mxu0 0
    %186 = vmatprep.subr.bf16.mxu0 0
    %187 = vmatpush1.bf16.msra.mxu0 0
    %188 = vmatprep.subr.bf16.mxu0 0
    %189 = vmatpush1.bf16.msra.mxu0 0
    %190 = vmatprep.subr.bf16.mxu0 0
    %191 = vmatpush1.bf16.msra.mxu0 0
    %192 = vmatprep.subr.bf16.mxu0 0
    %193 = vmatpush1.bf16.msra.mxu0 0
    %194 = vmatprep.subr.bf16.mxu0 0
    %195 = vmatpush1.bf16.msra.mxu0 0
    %196 = vmatprep.subr.bf16.mxu0 0
    %197 = vmatpush1.bf16.msra.mxu0 0
    %198 = vmatprep.subr.bf16.mxu0 0
    %199 = vmatpush1.bf16.msra.mxu0 0
    %200 = vmatprep.mubr.bf16.mxu0 0
    %201 = vmatmul.mubr.bf16.gmra.mrb[0].mxu0 %v60
    %v202 = vpop.f32.mrb[0].mxu0
    %v203 = vadd.f32 %v81, %v202
    %v204 = vpop.f32.mrb[0].mxu0
    %v205 = vadd.f32 %v85, %v204
    %v206 = vpop.f32.mrb[0].mxu0
    %v207 = vpop.f32.mrb[0].mxu0
    %208 = vdwg.mxu0
    %v209 = vmax.f32 %v203, 0.0
    %v210 = vmax.f32 %v205, 0.0
    %s211 = scalar_lea.vmem %s4, 3
    %v212 = vld [vmem:[%s211] ss:$8 sm:$0x3]
    %s213 = scalar_lea.vmem %s4, 4
    %v214 = vld [vmem:[%s213] ss:$8 sm:$0x3]
    %v215 = vrot.slane %v209, 4
    %v216 = vadd.f32 %v209, %v215
    %v217 = vrot.slane %v216, 2
    %v218 = vadd.f32 %v216, %v217
    %v219 = vrot.slane %v218, 1
    %v220 = vadd.f32 %v218, %v219
    %v221 = vrot.slane %v210, 4
    %v222 = vadd.f32 %v210, %v221
    %v223 = vrot.slane %v222, 2
    %v224 = vadd.f32 %v222, %v223
    %v225 = vrot.slane %v224, 1
    %v226 = vadd.f32 %v224, %v225
    %v227 = vmul.f32 %v220, %v42
    %v228 = vmul.f32 %v226, %v42
    %v229 = vsub.f32 %v209, %v227
    %v230 = vsub.f32 %v210, %v228
    %v231 = vmul.f32 %v229, %v229
    %v232 = vmul.f32 %v230, %v230
    %v233 = vrot.slane %v231, 4
    %v234 = vadd.f32 %v231, %v233
    %v235 = vrot.slane %v234, 2
    %v236 = vadd.f32 %v234, %v235
    %v237 = vrot.slane %v236, 1
    %v238 = vadd.f32 %v236, %v237
    %v239 = vrot.slane %v232, 4
    %v240 = vadd.f32 %v232, %v239
    %v241 = vrot.slane %v240, 2
    %v242 = vadd.f32 %v240, %v241
    %v243 = vrot.slane %v242, 1
    %v244 = vadd.f32 %v242, %v243
    %v245 = vmul.f32 %v238, %v42
    %v246 = vmul.f32 %v244, %v42
    %v247 = vadd.f32 %v245, 1e-05
    %v248 = vadd.f32 %v246, 1e-05
    %v249 = vrsqrt.pop %v247
    %v250 = vrsqrt.pop %v248
    %v251 = vmul.f32 %v229, %v249
    %v252 = vmul.f32 %v230, %v250
    %v254 = vlaneseq
    %v255 = vshrl.u32 %v254, 7
    %v256 = vsub.s32 0, %v255
    %v257 = vrot.slane %v212, %v256
    %v258 = vlaneseq
    %v259 = vshrl.u32 %v258, 7
    %v260 = vsub.s32 1, %v259
    %v261 = vrot.slane %v212, %v260
    %v264 = vmul.f32 %v251, %v257
    %v265 = vmul.f32 %v252, %v261
    %v267 = vlaneseq
    %v268 = vshrl.u32 %v267, 7
    %v269 = vsub.s32 0, %v268
    %v270 = vrot.slane %v214, %v269
    %v271 = vlaneseq
    %v272 = vshrl.u32 %v271, 7
    %v273 = vsub.s32 1, %v272
    %v274 = vrot.slane %v214, %v273
    %v277 = vadd.f32 %v264, %v270
    %v278 = vadd.f32 %v265, %v274
    %v279 = vld [vmem:[%s4 + $0x5] ss:$0 sm:$0xff]
    %v280 = vpack.c.bf16 %v277, %v277
    %v281 = vpack.c.bf16 %v278, %v278
    %v282 = vld [vmem:[%s2] sm:$0xf]
    %v283 = vld [vmem:[%s2 + $0x4] sm:$0xf]
    %v284 = vld [vmem:[%s2 + $0x8] sm:$0xf]
    %v285 = vld [vmem:[%s2 + $0xc] sm:$0xf]
    %v286 = vld [vmem:[%s2 + $0x10] sm:$0xf]
    %v287 = vld [vmem:[%s2 + $0x14] sm:$0xf]
    %v288 = vld [vmem:[%s2 + $0x18] sm:$0xf]
    %v289 = vld [vmem:[%s2 + $0x1c] sm:$0xf]
    %v290 = vld [vmem:[%s2 + $0x20] sm:$0xf]
    %v291 = vld [vmem:[%s2 + $0x24] sm:$0xf]
    %v292 = vld [vmem:[%s2 + $0x28] sm:$0xf]
    %v293 = vld [vmem:[%s2 + $0x2c] sm:$0xf]
    %v294 = vld [vmem:[%s2 + $0x30] sm:$0xf]
    %v295 = vld [vmem:[%s2 + $0x34] sm:$0xf]
    %v296 = vld [vmem:[%s2 + $0x38] sm:$0xf]
    %v297 = vld [vmem:[%s2 + $0x3c] sm:$0xf]
    %v298 = vld [vmem:[%s2 + $0x40] sm:$0xf]
    %v299 = vld [vmem:[%s2 + $0x44] sm:$0xf]
    %v300 = vld [vmem:[%s2 + $0x48] sm:$0xf]
    %v301 = vld [vmem:[%s2 + $0x4c] sm:$0xf]
    %v302 = vld [vmem:[%s2 + $0x50] sm:$0xf]
    %v303 = vld [vmem:[%s2 + $0x54] sm:$0xf]
    %v304 = vld [vmem:[%s2 + $0x58] sm:$0xf]
    %v305 = vld [vmem:[%s2 + $0x5c] sm:$0xf]
    %v306 = vld [vmem:[%s2 + $0x60] sm:$0xf]
    %v307 = vld [vmem:[%s2 + $0x64] sm:$0xf]
    %v308 = vld [vmem:[%s2 + $0x68] sm:$0xf]
    %v309 = vld [vmem:[%s2 + $0x6c] sm:$0xf]
    %v310 = vld [vmem:[%s2 + $0x70] sm:$0xf]
    %v311 = vld [vmem:[%s2 + $0x74] sm:$0xf]
    %v312 = vld [vmem:[%s2 + $0x78] sm:$0xf]
    %v313 = vld [vmem:[%s2 + $0x7c] sm:$0xf]
    %v346 = vunpack.c.l.b16 %v282
    %v347 = vunpack.c.l.b16 %v283
    %v348 = vunpack.c.l.b16 %v284
    %v349 = vunpack.c.l.b16 %v285
    %v350 = vunpack.c.l.b16 %v286
    %v351 = vunpack.c.l.b16 %v287
    %v352 = vunpack.c.l.b16 %v288
    %v353 = vunpack.c.l.b16 %v289
    %v354 = vunpack.c.l.b16 %v290
    %v355 = vunpack.c.l.b16 %v291
    %v356 = vunpack.c.l.b16 %v292
    %v357 = vunpack.c.l.b16 %v293
    %v358 = vunpack.c.l.b16 %v294
    %v359 = vunpack.c.l.b16 %v295
    %v360 = vunpack.c.l.b16 %v296
    %v361 = vunpack.c.l.b16 %v297
    %v362 = vunpack.c.l.b16 %v298
    %v363 = vunpack.c.l.b16 %v299
    %v364 = vunpack.c.l.b16 %v300
    %v365 = vunpack.c.l.b16 %v301
    %v366 = vunpack.c.l.b16 %v302
    %v367 = vunpack.c.l.b16 %v303
    %v368 = vunpack.c.l.b16 %v304
    %v369 = vunpack.c.l.b16 %v305
    %v370 = vunpack.c.l.b16 %v306
    %v371 = vunpack.c.l.b16 %v307
    %v372 = vunpack.c.l.b16 %v308
    %v373 = vunpack.c.l.b16 %v309
    %v374 = vunpack.c.l.b16 %v310
    %v375 = vunpack.c.l.b16 %v311
    %v376 = vunpack.c.l.b16 %v312
    %v377 = vunpack.c.l.b16 %v313
    %v378 = vpack.c.b16 %v347, %v346
    %v379 = vpack.c.b16 %v349, %v348
    %v380 = vpack.c.b16 %v351, %v350
    %v381 = vpack.c.b16 %v353, %v352
    %v382 = vpack.c.b16 %v355, %v354
    %v383 = vpack.c.b16 %v357, %v356
    %v384 = vpack.c.b16 %v359, %v358
    %v385 = vpack.c.b16 %v361, %v360
    %v386 = vpack.c.b16 %v363, %v362
    %v387 = vpack.c.b16 %v365, %v364
    %v388 = vpack.c.b16 %v367, %v366
    %v389 = vpack.c.b16 %v369, %v368
    %v390 = vpack.c.b16 %v371, %v370
    %v391 = vpack.c.b16 %v373, %v372
    %v392 = vpack.c.b16 %v375, %v374
    %v393 = vpack.c.b16 %v377, %v376
    %410 = vmatprep.subr.bf16.mxu0 0
    %411 = vmatpush1.bf16.msra.mxu0 %v378
    %412 = vmatprep.subr.bf16.mxu0 0
    %413 = vmatpush1.bf16.msra.mxu0 %v379
    %414 = vmatprep.subr.bf16.mxu0 0
    %415 = vmatpush1.bf16.msra.mxu0 %v380
    %416 = vmatprep.subr.bf16.mxu0 0
    %417 = vmatpush1.bf16.msra.mxu0 %v381
    %418 = vmatprep.subr.bf16.mxu0 0
    %419 = vmatpush1.bf16.msra.mxu0 %v382
    %420 = vmatprep.subr.bf16.mxu0 0
    %421 = vmatpush1.bf16.msra.mxu0 %v383
    %422 = vmatprep.subr.bf16.mxu0 0
    %423 = vmatpush1.bf16.msra.mxu0 %v384
    %424 = vmatprep.subr.bf16.mxu0 0
    %425 = vmatpush1.bf16.msra.mxu0 %v385
    %426 = vmatprep.subr.bf16.mxu0 0
    %427 = vmatpush1.bf16.msra.mxu0 %v386
    %428 = vmatprep.subr.bf16.mxu0 0
    %429 = vmatpush1.bf16.msra.mxu0 %v387
    %430 = vmatprep.subr.bf16.mxu0 0
    %431 = vmatpush1.bf16.msra.mxu0 %v388
    %432 = vmatprep.subr.bf16.mxu0 0
    %433 = vmatpush1.bf16.msra.mxu0 %v389
    %434 = vmatprep.subr.bf16.mxu0 0
    %435 = vmatpush1.bf16.msra.mxu0 %v390
    %436 = vmatprep.subr.bf16.mxu0 0
    %437 = vmatpush1.bf16.msra.mxu0 %v391
    %438 = vmatprep.subr.bf16.mxu0 0
    %439 = vmatpush1.bf16.msra.mxu0 %v392
    %440 = vmatprep.subr.bf16.mxu0 0
    %441 = vmatpush1.bf16.msra.mxu0 %v393
    %442 = vmatprep.mubr.bf16.mxu0 %v281
    %443 = vmatmul.mubr.bf16.gmra.mrb[0].mxu0 %v280
    %v444 = vpop.f32.mrb[0].mxu0
    %v445 = vadd.f32 %v279, %v444
    %v446 = vpop.f32.mrb[0].mxu0
    %v447 = vpop.f32.mrb[0].mxu0
    %v448 = vpop.f32.mrb[0].mxu0
    %449 = vdwg.mxu0
    %v450 = vmax.f32 %v445, 0.0
    %v451 = vld [vmem:[%s4 + $0x6] ss:$0 sm:$0xff]
    %v452 = vld [vmem:[%s4 + $0x7] ss:$0 sm:$0xff]
    %vm453 = vcmask 523264
    %v454 = vsel %vm453, %v450, 0.0
    %v455 = vrot.slane %v454, 4
    %v456 = vadd.f32 %v454, %v455
    %v457 = vrot.slane %v456, 2
    %v458 = vadd.f32 %v456, %v457
    %v459 = vrot.slane %v458, 1
    %v460 = vadd.f32 %v458, %v459
    %v461 = vmul.f32 %v460, %v42
    %v462 = vsub.f32 %v450, %v461
    %v463 = vmul.f32 %v462, %v462
    %v464 = vsel %vm453, %v463, 0.0
    %v465 = vrot.slane %v464, 4
    %v466 = vadd.f32 %v464, %v465
    %v467 = vrot.slane %v466, 2
    %v468 = vadd.f32 %v466, %v467
    %v469 = vrot.slane %v468, 1
    %v470 = vadd.f32 %v468, %v469
    %v471 = vmul.f32 %v470, %v42
    %v472 = vadd.f32 %v471, 1e-05
    %v473 = vrsqrt.pop %v472
    %v474 = vmul.f32 %v462, %v473
    %v475 = vmul.f32 %v474, %v451
    %v476 = vadd.f32 %v475, %v452
    %v477 = vld [vmem:[%s4 + $0x10] ss:$0 sm:$0xff]
    %v478 = vpack.c.bf16 %v476, %v476
    %v479 = vld [vmem:[%s3] sm:$0xf]
    %v480 = vld [vmem:[%s3 + $0x4] sm:$0xf]
    %v481 = vld [vmem:[%s3 + $0x8] sm:$0xf]
    %v482 = vld [vmem:[%s3 + $0xc] sm:$0xf]
    %v483 = vld [vmem:[%s3 + $0x10] sm:$0xf]
    %v484 = vld [vmem:[%s3 + $0x14] sm:$0xf]
    %v485 = vld [vmem:[%s3 + $0x18] sm:$0xf]
    %v486 = vld [vmem:[%s3 + $0x1c] sm:$0xf]
    %v495 = vunpack.c.l.b16 %v479
    %v496 = vunpack.c.l.b16 %v480
    %v497 = vunpack.c.l.b16 %v481
    %v498 = vunpack.c.l.b16 %v482
    %v499 = vunpack.c.l.b16 %v483
    %v500 = vunpack.c.l.b16 %v484
    %v501 = vunpack.c.l.b16 %v485
    %v502 = vunpack.c.l.b16 %v486
    %v503 = vpack.c.b16 %v496, %v495
    %v504 = vpack.c.b16 %v498, %v497
    %v505 = vpack.c.b16 %v500, %v499
    %v506 = vpack.c.b16 %v502, %v501
    %v512 = vsel %vm453, %v478, 0
    %514 = vmatprep.subr.bf16.mxu0 0
    %515 = vmatpush1.bf16.msra.mxu0 %v503
    %516 = vmatprep.subr.bf16.mxu0 0
    %517 = vmatpush1.bf16.msra.mxu0 %v504
    %518 = vmatprep.subr.bf16.mxu0 0
    %519 = vmatpush1.bf16.msra.mxu0 %v505
    %520 = vmatprep.subr.bf16.mxu0 0
    %521 = vmatpush1.bf16.msra.mxu0 %v506
    %522 = vmatprep.subr.bf16.mxu0 0
    %523 = vmatpush1.bf16.msra.mxu0 0
    %524 = vmatprep.subr.bf16.mxu0 0
    %525 = vmatpush1.bf16.msra.mxu0 0
    %526 = vmatprep.subr.bf16.mxu0 0
    %527 = vmatpush1.bf16.msra.mxu0 0
    %528 = vmatprep.subr.bf16.mxu0 0
    %529 = vmatpush1.bf16.msra.mxu0 0
    %530 = vmatprep.subr.bf16.mxu0 0
    %531 = vmatpush1.bf16.msra.mxu0 0
    %532 = vmatprep.subr.bf16.mxu0 0
    %533 = vmatpush1.bf16.msra.mxu0 0
    %534 = vmatprep.subr.bf16.mxu0 0
    %535 = vmatpush1.bf16.msra.mxu0 0
    %536 = vmatprep.subr.bf16.mxu0 0
    %537 = vmatpush1.bf16.msra.mxu0 0
    %538 = vmatprep.subr.bf16.mxu0 0
    %539 = vmatpush1.bf16.msra.mxu0 0
    %540 = vmatprep.subr.bf16.mxu0 0
    %541 = vmatpush1.bf16.msra.mxu0 0
    %542 = vmatprep.subr.bf16.mxu0 0
    %543 = vmatpush1.bf16.msra.mxu0 0
    %544 = vmatprep.subr.bf16.mxu0 0
    %545 = vmatpush1.bf16.msra.mxu0 0
    %546 = vmatprep.mubr.bf16.mxu0 0
    %547 = vmatmul.mubr.bf16.gmra.mrb[0].mxu0 %v512
    %v548 = vpop.f32.mrb[0].mxu0
    %v549 = vadd.f32 %v477, %v548
    %v550 = vpop.f32.mrb[0].mxu0
    %v551 = vpop.f32.mrb[0].mxu0
    %v552 = vpop.f32.mrb[0].mxu0
    %553 = vdwg.mxu0
    %v554 = vmax.f32 %v549, 0.0
    %555 = vst [vmem:[%s5] sm:$0xff] %v554
    // Predicated region
    $region26: #{net_forward.1} parent=1 // pred_check
      _
    $region27: #{net_forward.1} parent=1 // pred_check_branch
      %557 = sbr.rel (0) target = $region29
    $region28: #{net_forward.1} parent=1 // pred_region
      _
    $region29: #{net_forward.1} parent=1 // pred_fallthru
      _
    // Predicated region
    $region30: #{net_forward.1} parent=1 // pred_check
      _
    $region31: #{net_forward.1} parent=1 // pred_check_branch
      %559 = sbr.rel (0) target = $region33
    $region32: #{net_forward.1} parent=1 // pred_region
      _
    $region33: #{net_forward.1} parent=1 // pred_fallthru
      _
    %560 = vsyncpa [#allocation3], 1

</llo_original>
